<compile_context>
chip_gen: v6e
topology: v6e:2x2x1
jax: 0.10.0
libtpu: 0.0.40
codegen_flags: <defaults>
</compile_context>

<pallas_src>
import jax
import jax.numpy as jnp
import numpy as np
from jax.experimental import pallas as pl
from jax.experimental.pallas import tpu as pltpu


def _round_up(n, m):
    return ((n + m - 1) // m) * m


def _pctsp_init_embed_kernel(feats_ref, w_ref, out_ref):
    # feats_ref : [tr, 8]  merged per-row features (depot/city already encoded)
    # w_ref     : [8, E]   packed [Wn0..Wn3, Wd0, Wd1, b_dep, b_node], VMEM-resident
    # out_ref   : [tr, E]
    out_ref[...] = jnp.dot(
        feats_ref[...], w_ref[...],
        preferred_element_type=jnp.float32).astype(out_ref.dtype)


def pctsp_init_embedding(locs, prize, penalty, w_dep, b_dep, w_node, b_node,
                         *, tile_rows=4096, out_dtype=jnp.float32):
    """locs: [B, N+1, 2]; prize: [B, N]; penalty: [B, N+1] -> [B, N+1, E]."""
    B, N1, two = locs.shape
    assert two == 2
    E = w_node.shape[1]
    R = B * N1
    dt = jnp.float32

    # ---- Wrapper-side feature packing (tiny: 32 B/row vs 512 B/row output) --
    x = locs[..., 0].astype(dt)                                   # [B, N1]
    y = locs[..., 1].astype(dt)                                   # [B, N1]
    depot_mask = (jnp.arange(N1) == 0).astype(dt)[None, :]        # [1, N1]
    city_mask = 1.0 - depot_mask
    prize_full = jnp.pad(prize.astype(dt), ((0, 0), (1, 0)))      # 0 at depot
    pen_city = penalty.astype(dt) * city_mask                     # drop penalty[:,0]

    feats = jnp.stack(
        [x * city_mask, y * city_mask, prize_full, pen_city,      # city branch
         x * depot_mask, y * depot_mask,                          # depot branch
         jnp.broadcast_to(depot_mask, (B, N1)),                   # -> + b_dep
         jnp.broadcast_to(city_mask, (B, N1))],                   # -> + b_node
        axis=-1).reshape(R, 8)                                    # [R, 8]

    # ---- Packed, VMEM-resident parameter matrix [8, E] ----------------------
    w_packed = jnp.concatenate(
        [w_node.astype(dt), w_dep.astype(dt),
         b_dep.reshape(1, E).astype(dt), b_node.reshape(1, E).astype(dt)],
        axis=0)                                                   # [8, E]

    # ---- Row tiling ----------------------------------------------------------
    tr = tile_rows if R >= tile_rows else _round_up(R, 8)
    n_steps = pl.cdiv(R, tr)
    r_pad = n_steps * tr
    if r_pad != R:
        # Zero-pad the (tiny) input so every input block read is well-defined;
        # the out-of-bounds rows of the final output block are dropped by Pallas.
        feats = jnp.pad(feats, ((0, r_pad - R), (0, 0)))

    cost = pl.CostEstimate(
        flops=2 * R * 8 * E,
        transcendentals=0,
        bytes_accessed=4 * (r_pad * 8 + 8 * E) + R * E * jnp.dtype(out_dtype).itemsize)

    out_flat = pl.pallas_call(
        _pctsp_init_embed_kernel,
        out_shape=jax.ShapeDtypeStruct((R, E), out_dtype),
        grid=(n_steps,),
        in_specs=[pl.BlockSpec((tr, 8), lambda i: (i, 0)),        # merged features
                  pl.BlockSpec((8, E), lambda i: (0, 0))],        # resident weights
        out_specs=pl.BlockSpec((tr, E), lambda i: (i, 0)),
        compiler_params=pltpu.CompilerParams(
            dimension_semantics=("parallel",),
            vmem_limit_bytes=32 * 1024 * 1024),
        cost_estimate=cost,
    )(feats, w_packed)

    return out_flat.reshape(B, N1, E)


def _reference(locs, prize, penalty, w_dep, b_dep, w_node, b_node):
    depot = locs[:, :1, :]
    cities = locs[:, 1:, :]
    dep_emb = depot @ w_dep + b_dep
    feats = jnp.concatenate(
        [cities, prize[..., None], penalty[:, 1:, None]], axis=-1)
    node_emb = feats @ w_node + b_node
    return jnp.concatenate([dep_emb, node_emb], axis=1)


if __name__ == "__main__":
    B, N_CITIES, EMBED_DIM = 2, 8, 128      # E = 128 -> lane-dense stores
    N1 = N_CITIES + 1                       # R = B * (N+1) = 18

    key = jax.random.PRNGKey(0)
    k = jax.random.split(key, 7)

    # Inputs (what the TensorDict `td` would contain).
    locs = jax.random.uniform(k[0], (B, N1, 2), dtype=jnp.float32)
    expected_prize = jax.random.uniform(k[1], (B, N_CITIES), dtype=jnp.float32)
    penalty = jax.random.uniform(k[2], (B, N1), dtype=jnp.float32)

    # Parameters (nn.Linear weights stored transposed as [in_features, E]).
    w_node = jax.random.normal(k[3], (4, EMBED_DIM), dtype=jnp.float32) * 0.1
    b_node = jax.random.normal(k[4], (1, EMBED_DIM), dtype=jnp.float32) * 0.1
    w_dep = jax.random.normal(k[5], (2, EMBED_DIM), dtype=jnp.float32) * 0.1
    b_dep = jax.random.normal(k[6], (1, EMBED_DIM), dtype=jnp.float32) * 0.1

    ref = _reference(locs, expected_prize, penalty, w_dep, b_dep, w_node, b_node)

    # (1) default tile: whole problem in one (padded) block.
    out1 = jax.block_until_ready(pctsp_init_embedding(
        locs, expected_prize, penalty, w_dep, b_dep, w_node, b_node))

    # (2) forced small tile: 3 grid steps with a partial final tile
    #     (R=18, tr=8), exercising the pipelined path and OOB write masking.
    out2 = jax.block_until_ready(pctsp_init_embedding(
        locs, expected_prize, penalty, w_dep, b_dep, w_node, b_node,
        tile_rows=8))

    assert out1.shape == (B, N1, EMBED_DIM), out1.shape
    assert out2.shape == (B, N1, EMBED_DIM), out2.shape
    assert np.allclose(np.asarray(out1), np.asarray(ref), atol=1e-5, rtol=1e-5)
    assert np.allclose(np.asarray(out2), np.asarray(ref), atol=1e-5, rtol=1e-5)
    print("KERNEL_OK")
</pallas_src>

<mosaic_0001>
module attributes {stable_mosaic.version = 11 : i64} {
  func.func @_pctsp_init_embed_kernel(%arg0: i32, %arg1: memref<24x8xf32, #tpu.memory_space<vmem>>, %arg2: memref<8x128xf32, #tpu.memory_space<vmem>>, %arg3: memref<24x128xf32, #tpu.memory_space<vmem>>) attributes {dimension_semantics = [#tpu.dimension_semantics<parallel>], iteration_bounds = array<i64: 1>, scalar_prefetch = 0 : i64, scratch_operands = 0 : i64, tpu.core_type = #tpu.core_type<tc>, window_params = [{transform_indices = @transform_0, window_bounds = array<i64: 24, 8>}, {pipeline_mode = #tpu.pipeline_mode<synchronous>, transform_indices = @transform_1, window_bounds = array<i64: 8, 128>}, {transform_indices = @transform_2, window_bounds = array<i64: 24, 128>}]} {
    %c0 = arith.constant 0 : index
    %c0_0 = arith.constant 0 : index
    %0 = vector.load %arg1[%c0, %c0_0] : memref<24x8xf32, #tpu.memory_space<vmem>>, vector<24x8xf32>
    %c0_1 = arith.constant 0 : index
    %c0_2 = arith.constant 0 : index
    %1 = vector.load %arg2[%c0_1, %c0_2] : memref<8x128xf32, #tpu.memory_space<vmem>>, vector<8x128xf32>
    %cst = arith.constant dense<0.000000e+00> : vector<24x128xf32>
    %2 = tpu.matmul %0, %1, %cst {dimension_numbers = #tpu.dot_dimension_numbers<[1], [0], [0], [1], [0, 0, 1, 1], [], []>} : vector<24x8xf32>, vector<8x128xf32>, vector<24x128xf32> -> vector<24x128xf32>
    %c0_3 = arith.constant 0 : index
    %c0_4 = arith.constant 0 : index
    %3 = vector.load %arg3[%c0_3, %c0_4] : memref<24x128xf32, #tpu.memory_space<vmem>>, vector<24x128xf32>
    tpu.vector_store %arg3[%c0_3, %c0_4], %2 {strides = array<i32>} : memref<24x128xf32, #tpu.memory_space<vmem>>, vector<24x128xf32>,
    return
  }
  func.func @transform_0(%arg0: i32) -> (i32, i32) {
    %c0_i32 = arith.constant 0 : i32
    %c0_i32_0 = arith.constant 0 : i32
    return %arg0, %c0_i32 : i32, i32
  }
  func.func @transform_1(%arg0: i32) -> (i32, i32) {
    %c0_i32 = arith.constant 0 : i32
    %c0_i32_0 = arith.constant 0 : i32
    %c0_i32_1 = arith.constant 0 : i32
    return %c0_i32, %c0_i32_0 : i32, i32
  }
  func.func @transform_2(%arg0: i32) -> (i32, i32) {
    %c0_i32 = arith.constant 0 : i32
    %c0_i32_0 = arith.constant 0 : i32
    return %arg0, %c0_i32 : i32, i32
  }
}

</mosaic_0001>

<llo_original>
// kernel: tpu_custom_call.1
$region0: #{tpu_custom_call.1}
  #allocation0 [shape = 'u32[]', space=smem, size = 0x4, offset = 0x4, fixed_abs, tag = 'smem constant byte address 0x4 - core index']
  #allocation1 [shape = 'u32[144,128]{1,0:T(1,128)}', space=vmem, size = 0x12000, scoped, tag = 'internal scratch']
  %s0 = inlined_call_operand.vmem [shape: f32[24,8], index: 0, kind: input, shape index: {}]
  %s1 = inlined_call_operand.vmem [shape: f32[8,128], index: 1, kind: input, shape index: {}]
  %s2 = inlined_call_operand.hbm [shape: f32[18,128], index: 2, kind: output, shape index: {}]
  %s3 = sld [smem:[#allocation0]]
  $region18: #{tpu_custom_call.1} parent=0
    _
  %s5 = ssub.s32 1, %s3
  %s6 = scalar_select 0, %s5, %s3
  $region1: #{tpu_custom_call.1} parent=0
    #allocation2 [shape = 'u8[12288]{0}', space=vmem, size = 0x3000, scoped, tag = 'output window, operand 0, single buffered']
    #allocation3 [shape = 's32[1]{0}', space=sflag, size = 0x4, scoped, tag = 'scoped memory for tpu_custom_call.1']
    %7 = vsyncpa [#allocation3], 0
    // Predicated region
    $region2: #{tpu_custom_call.1} parent=1 // pred_check
      _
    $region3: #{tpu_custom_call.1} parent=1 // pred_check_branch
      %9 = sbr.rel (0) target = $region5
    $region4: #{tpu_custom_call.1} parent=1 // pred_region
      _
    $region5: #{tpu_custom_call.1} parent=1 // pred_fallthru
      _
    // Predicated region
    $region6: #{tpu_custom_call.1} parent=1 // pred_check
      _
    $region7: #{tpu_custom_call.1} parent=1 // pred_check_branch
      %11 = sbr.rel (0) target = $region9
    $region8: #{tpu_custom_call.1} parent=1 // pred_region
      _
    $region9: #{tpu_custom_call.1} parent=1 // pred_fallthru
      _
    %v12 = vld [vmem:[%s0] sm:$0xff]
    %v13 = vld [vmem:[%s0 + $0x8] sm:$0xff]
    %v14 = vld [vmem:[%s0 + $0x10] sm:$0xff]
    %v15 = vld [vmem:[%s1] sm:$0xff]
    %vm16 = vcmask 64512
    %v18 = vsel %vm16, %v12, 0
    %v21 = vsel %vm16, %v13, 0
    %v24 = vsel %vm16, %v14, 0
    %26 = vmatprep.subr.mxu0 0.0
    %27 = vmatpush1.msra.mxu0 0.0
    %28 = vmatprep.subr.mxu0 0.0
    %29 = vmatpush1.msra.mxu0 0.0
    %30 = vmatprep.subr.mxu0 0.0
    %31 = vmatpush1.msra.mxu0 0.0
    %32 = vmatprep.subr.mxu0 0.0
    %33 = vmatpush1.msra.mxu0 0.0
    %34 = vmatprep.subr.mxu0 0.0
    %35 = vmatpush1.msra.mxu0 0.0
    %36 = vmatprep.subr.mxu0 0.0
    %37 = vmatpush1.msra.mxu0 0.0
    %38 = vmatprep.subr.mxu0 0.0
    %39 = vmatpush1.msra.mxu0 0.0
    %40 = vmatprep.subr.mxu0 0.0
    %41 = vmatpush1.msra.mxu0 0.0
    %42 = vmatprep.subr.mxu0 0.0
    %43 = vmatpush1.msra.mxu0 0.0
    %44 = vmatprep.subr.mxu0 0.0
    %45 = vmatpush1.msra.mxu0 0.0
    %46 = vmatprep.subr.mxu0 0.0
    %47 = vmatpush1.msra.mxu0 0.0
    %48 = vmatprep.subr.mxu0 0.0
    %49 = vmatpush1.msra.mxu0 0.0
    %50 = vmatprep.subr.mxu0 0.0
    %51 = vmatpush1.msra.mxu0 0.0
    %52 = vmatprep.subr.mxu0 0.0
    %53 = vmatpush1.msra.mxu0 0.0
    %54 = vmatprep.subr.mxu0 0.0
    %55 = vmatpush1.msra.mxu0 0.0
    %56 = vmatprep.subr.mxu0 0.0
    %57 = vmatpush1.msra.mxu0 %v15
    %58 = vmatprep.subr.mxu0 0.0
    %59 = vmatpush2.msra.mxu0 0.0
    %60 = vmatprep.subr.mxu0 0.0
    %61 = vmatpush2.msra.mxu0 0.0
    %62 = vmatprep.subr.mxu0 0.0
    %63 = vmatpush2.msra.mxu0 0.0
    %64 = vmatprep.subr.mxu0 0.0
    %65 = vmatpush2.msra.mxu0 0.0
    %66 = vmatprep.subr.mxu0 0.0
    %67 = vmatpush2.msra.mxu0 0.0
    %68 = vmatprep.subr.mxu0 0.0
    %69 = vmatpush2.msra.mxu0 0.0
    %70 = vmatprep.subr.mxu0 0.0
    %71 = vmatpush2.msra.mxu0 0.0
    %72 = vmatprep.subr.mxu0 0.0
    %73 = vmatpush2.msra.mxu0 0.0
    %74 = vmatprep.subr.mxu0 0.0
    %75 = vmatpush2.msra.mxu0 0.0
    %76 = vmatprep.subr.mxu0 0.0
    %77 = vmatpush2.msra.mxu0 0.0
    %78 = vmatprep.subr.mxu0 0.0
    %79 = vmatpush2.msra.mxu0 0.0
    %80 = vmatprep.subr.mxu0 0.0
    %81 = vmatpush2.msra.mxu0 0.0
    %82 = vmatprep.subr.mxu0 0.0
    %83 = vmatpush2.msra.mxu0 0.0
    %84 = vmatprep.subr.mxu0 0.0
    %85 = vmatpush2.msra.mxu0 0.0
    %86 = vmatprep.subr.mxu0 0.0
    %87 = vmatpush2.msra.mxu0 0.0
    %88 = vmatprep.subr.mxu0 0.0
    %89 = vmatpush2.msra.mxu0 0.0
    %90 = vmatprep.mubr.f32.mxu0 0.0
    %91 = vmatmul.mubr.f32.gmra.mxu0 %v18
    %v92 = vpop.f32.mrf.mxu0
    %v93 = vadd.f32 0.0, %v92
    %v94 = vpop.f32.mrf.mxu0
    %95 = vmatprep.mubr.f32.mxu0 0.0
    %96 = vmatmul.mubr.f32.gmra.mxu0 %v21
    %v97 = vpop.f32.mrf.mxu0
    %v98 = vadd.f32 0.0, %v97
    %v99 = vpop.f32.mrf.mxu0
    %100 = vmatprep.mubr.f32.mxu0 0.0
    %101 = vmatmul.mubr.f32.gmra.mxu0 %v24
    %v102 = vpop.f32.mrf.mxu0
    %v103 = vadd.f32 0.0, %v102
    %v104 = vpop.f32.mrf.mxu0
    %105 = vdwg.mxu0
    %106 = vst [vmem:[#allocation2] sm:$0xff] %v93
    %107 = vst [vmem:[#allocation2 + $0x8] sm:$0xff] %v98
    %108 = vst [vmem:[#allocation2 + $0x10] sm:$0xff] %v103
    // Predicated region
    $region10: #{tpu_custom_call.1} parent=1 // pred_check
      _
    $region11: #{tpu_custom_call.1} parent=1 // pred_check_branch
      %110 = sbr.rel (0) target = $region13
    $region12: #{tpu_custom_call.1} parent=1 // pred_region
      %s112 = ssub.s32 384, 384
      %113 = vsyncadd [#allocation3], %s112
      %s114 = sshll.u32 [#allocation2], 4
      %s115 = int_to_ptr.vmem [resolvable:$true] %s114
      %120 = dma.vmem_to_hbm [thread:$0]  %s115, 384, %s2, [#allocation3], 128, 128, 8
    $region13: #{tpu_custom_call.1} parent=1 // pred_fallthru
      _
    // Predicated region
    $region14: #{tpu_custom_call.1} parent=1 // pred_check
      _
    $region15: #{tpu_custom_call.1} parent=1 // pred_check_branch
      %122 = sbr.rel (0) target = $region17
    $region16: #{tpu_custom_call.1} parent=1 // pred_region
      %123 = dma.done [#allocation3], 384
    $region17: #{tpu_custom_call.1} parent=1 // pred_fallthru
      _
    %124 = vsyncpa [#allocation3], 1

</llo_original>
